<compile_context>
chip_gen: v5e
topology: v5e:2x2
jax: 0.10.0
libtpu: 0.0.40
codegen_flags: <defaults>
</compile_context>

<pallas_src>
import functools

import jax
import jax.numpy as jnp
from jax.experimental import pallas as pl
from jax.experimental.pallas import tpu as pltpu


def _silog_partial_kernel(pred_ref, target_ref, sd_ref, sd2_ref, cnt_ref, *,
                          n_elems, tm, lanes, blocks_per_split):
    c = pl.program_id(0)          # split (parallel) index
    i = pl.program_id(1)          # row-block (reduction) index within split

    @pl.when(i == 0)
    def _():
        sd_ref[...] = jnp.zeros_like(sd_ref)
        sd2_ref[...] = jnp.zeros_like(sd2_ref)
        cnt_ref[...] = jnp.zeros_like(cnt_ref)

    # Logical (unclamped) block id -> first element index of this tile.
    blk = c * blocks_per_split + i
    elem_base = blk * (tm * lanes)

    t = target_ref[...].astype(jnp.float32)
    p = pred_ref[...].astype(jnp.float32)

    def accumulate(valid):
        # For masked elements both logs see 1.0, so d is exactly 0 without an
        # extra select (also shields against NaN from OOB-edge garbage).
        safe_t = jnp.where(valid, t, 1.0)
        safe_p = jnp.where(valid, p, 1.0)
        d = jnp.log(safe_t) - jnp.log(safe_p)
        # Lane-wise partial accumulation; cross-lane reduce deferred to the
        # JAX epilogue (runs once, off the hot loop).
        sd_ref[...] += jnp.sum(d, axis=0)[None, None, :]
        sd2_ref[...] += jnp.sum(d * d, axis=0)[None, None, :]
        cnt_ref[...] += jnp.sum(valid.astype(jnp.float32), axis=0)[None, None, :]

    # Only the tail block (or a duplicate block re-read by a clamped
    # overhanging split) needs element-index masking; everything else takes
    # the cheap path without iota/mask generation.
    needs_mask = elem_base + tm * lanes > n_elems

    @pl.when(jnp.logical_not(needs_mask))
    def _():
        accumulate(t > 0.0)

    @pl.when(needs_mask)
    def _():
        row_ids = jax.lax.broadcasted_iota(jnp.int32, (tm, lanes), 0)
        lane_ids = jax.lax.broadcasted_iota(jnp.int32, (tm, lanes), 1)
        in_bounds = (elem_base + row_ids * lanes + lane_ids) < n_elems
        accumulate(jnp.logical_and(t > 0.0, in_bounds))


def silog_loss(pred, target, lambd=0.5, *, tm=1024, lanes=128):
    """Scale-invariant log loss; same semantics as the PyTorch SiLogLoss."""
    pred_f = pred.reshape(-1)          # keep original dtype (no f32 upcast)
    target_f = target.reshape(-1)
    n = int(pred_f.shape[0])

    # Only pad to the next lane multiple (needed for the 2-D lane-dense view);
    # the padded tail is masked in-kernel so the values are irrelevant.
    rows = pl.cdiv(n, lanes)
    pad = rows * lanes - n
    if pad:
        pred_f = jnp.pad(pred_f, (0, pad), constant_values=1)
        target_f = jnp.pad(target_f, (0, pad), constant_values=0)

    pred2 = pred_f.reshape(rows, lanes)
    target2 = target_f.reshape(rows, lanes)

    # Tile rows: tm must be a multiple of 8, or equal the full row count.
    tm = max(8, (tm // 8) * 8)
    if rows <= tm:
        tm = rows
    total_blocks = pl.cdiv(rows, tm)

    # Shard the row blocks across TensorCores (helps on 2-TC chips like v7x,
    # neutral on single-core v5e/v6e where the grid just runs serially).
    n_split = 2 if total_blocks >= 2 else 1
    blocks_per_split = pl.cdiv(total_blocks, n_split)

    def in_map(c, i):
        # Clamp so an overhanging block of the last split never reads past the
        # array; its contribution is masked to exactly zero inside the kernel.
        return (jnp.minimum(c * blocks_per_split + i, total_blocks - 1), 0)

    kernel = functools.partial(
        _silog_partial_kernel, n_elems=n, tm=tm, lanes=lanes,
        blocks_per_split=blocks_per_split)

    out_sds = jax.ShapeDtypeStruct((n_split, 1, lanes), jnp.float32)
    sd, sd2, cnt = pl.pallas_call(
        kernel,
        out_shape=(out_sds, out_sds, out_sds),
        grid_spec=pltpu.PrefetchScalarGridSpec(
            num_scalar_prefetch=0,
            grid=(n_split, blocks_per_split),
            in_specs=[
                pl.BlockSpec((tm, lanes), in_map),
                pl.BlockSpec((tm, lanes), in_map),
            ],
            out_specs=[
                pl.BlockSpec((1, 1, lanes), lambda c, i: (c, 0, 0)),
                pl.BlockSpec((1, 1, lanes), lambda c, i: (c, 0, 0)),
                pl.BlockSpec((1, 1, lanes), lambda c, i: (c, 0, 0)),
            ],
        ),
        compiler_params=pltpu.CompilerParams(
            dimension_semantics=("parallel", "arbitrary")),
    )(pred2, target2)

    total_cnt = jnp.sum(cnt)
    mean_d = jnp.sum(sd) / total_cnt
    mean_d2 = jnp.sum(sd2) / total_cnt
    # Clamp tiny negative rounding error before sqrt (avoids spurious NaN).
    return jnp.sqrt(jnp.maximum(mean_d2 - lambd * mean_d * mean_d, 0.0))


def silog_loss_ref(pred, target, lambd=0.5):
    """Pure-JAX reference (masked mean), for correctness checking."""
    pred = pred.astype(jnp.float32)
    target = target.astype(jnp.float32)
    valid = target > 0.0
    safe_t = jnp.where(valid, target, 1.0)
    safe_p = jnp.where(valid, pred, 1.0)
    d = jnp.where(valid, jnp.log(safe_t) - jnp.log(safe_p), 0.0)
    cnt = jnp.sum(valid)
    mean_d = jnp.sum(d) / cnt
    mean_d2 = jnp.sum(d * d) / cnt
    return jnp.sqrt(mean_d2 - lambd * mean_d * mean_d)


if __name__ == "__main__":
    key = jax.random.PRNGKey(0)

    # --- Test 1: NCHW shape matching the module's typical use --------------
    k1, k2, k3 = jax.random.split(key, 3)
    B, C, H, W = 2, 4, 16, 16
    pred = jax.random.uniform(k1, (B, C, H, W), jnp.float32, 0.1, 10.0)
    target_raw = jax.random.uniform(k2, (B, C, H, W), jnp.float32, 0.1, 10.0)
    invalid = jax.random.uniform(k3, (B, C, H, W)) < 0.3
    target = jnp.where(invalid, 0.0, target_raw)

    loss = silog_loss(pred, target, lambd=0.5)
    jax.block_until_ready(loss)
    ref = silog_loss_ref(pred, target, lambd=0.5)
    assert jnp.allclose(loss, ref, rtol=1e-4, atol=1e-5), (loss, ref)

    # --- Test 2: ragged size, multi-block grid, 2-way split, tail masking --
    k4, k5, k6 = jax.random.split(jax.random.PRNGKey(1), 3)
    shape2 = (2, 1, 37, 53)   # 3922 elements: not a multiple of 128
    pred2 = jax.random.uniform(k4, shape2, jnp.float32, 0.1, 10.0)
    t2_raw = jax.random.uniform(k5, shape2, jnp.float32, 0.1, 10.0)
    invalid2 = jax.random.uniform(k6, shape2) < 0.3
    target2 = jnp.where(invalid2, 0.0, t2_raw)

    loss2 = silog_loss(pred2, target2, lambd=0.5, tm=8)
    jax.block_until_ready(loss2)
    ref2 = silog_loss_ref(pred2, target2, lambd=0.5)
    assert jnp.allclose(loss2, ref2, rtol=1e-4, atol=1e-5), (loss2, ref2)

    print("KERNEL_OK")
</pallas_src>

<mosaic_0001>
module attributes {stable_mosaic.version = 11 : i64} {
  func.func @_silog_partial_kernel(%arg0: i32, %arg1: i32, %arg2: memref<16x128xf32, #tpu.memory_space<vmem>>, %arg3: memref<16x128xf32, #tpu.memory_space<vmem>>, %arg4: memref<1x1x128xf32, #tpu.memory_space<vmem>>, %arg5: memref<1x1x128xf32, #tpu.memory_space<vmem>>, %arg6: memref<1x1x128xf32, #tpu.memory_space<vmem>>) attributes {dimension_semantics = [#tpu.dimension_semantics<parallel>, #tpu.dimension_semantics<arbitrary>], iteration_bounds = array<i64: 1, 1>, scalar_prefetch = 0 : i64, scratch_operands = 0 : i64, tpu.core_type = #tpu.core_type<tc>, window_params = [{transform_indices = @transform_0, window_bounds = array<i64: 16, 128>}, {transform_indices = @transform_1, window_bounds = array<i64: 16, 128>}, {transform_indices = @transform_2, window_bounds = array<i64: 1, 1, 128>}, {transform_indices = @transform_3, window_bounds = array<i64: 1, 1, 128>}, {transform_indices = @transform_4, window_bounds = array<i64: 1, 1, 128>}]} {
    %c0_i32 = arith.constant 0 : i32
    %0 = arith.cmpi eq, %arg1, %c0_i32 : i32
    %1 = arith.extui %0 : i1 to i32
    %c0_i32_0 = arith.constant 0 : i32
    %2 = arith.cmpi ne, %1, %c0_i32_0 : i32
    scf.if %2 {
      %cst = arith.constant 0.000000e+00 : f32
      %15 = vector.broadcast %cst : f32 to vector<1x1x128xf32>
      %c0_8 = arith.constant 0 : index
      %c0_9 = arith.constant 0 : index
      %c0_10 = arith.constant 0 : index
      %16 = vector.load %arg4[%c0_8, %c0_9, %c0_10] : memref<1x1x128xf32, #tpu.memory_space<vmem>>, vector<1x1x128xf32>
      tpu.vector_store %arg4[%c0_8, %c0_9, %c0_10], %15 {strides = array<i32>} : memref<1x1x128xf32, #tpu.memory_space<vmem>>, vector<1x1x128xf32>,
      %cst_11 = arith.constant 0.000000e+00 : f32
      %17 = vector.broadcast %cst_11 : f32 to vector<1x1x128xf32>
      %c0_12 = arith.constant 0 : index
      %c0_13 = arith.constant 0 : index
      %c0_14 = arith.constant 0 : index
      %18 = vector.load %arg5[%c0_12, %c0_13, %c0_14] : memref<1x1x128xf32, #tpu.memory_space<vmem>>, vector<1x1x128xf32>
      tpu.vector_store %arg5[%c0_12, %c0_13, %c0_14], %17 {strides = array<i32>} : memref<1x1x128xf32, #tpu.memory_space<vmem>>, vector<1x1x128xf32>,
      %cst_15 = arith.constant 0.000000e+00 : f32
      %19 = vector.broadcast %cst_15 : f32 to vector<1x1x128xf32>
      %c0_16 = arith.constant 0 : index
      %c0_17 = arith.constant 0 : index
      %c0_18 = arith.constant 0 : index
      %20 = vector.load %arg6[%c0_16, %c0_17, %c0_18] : memref<1x1x128xf32, #tpu.memory_space<vmem>>, vector<1x1x128xf32>
      tpu.vector_store %arg6[%c0_16, %c0_17, %c0_18], %19 {strides = array<i32>} : memref<1x1x128xf32, #tpu.memory_space<vmem>>, vector<1x1x128xf32>,
    } else {
    }
    %c1_i32 = arith.constant 1 : i32
    %3 = arith.muli %arg0, %c1_i32 : i32
    %4 = arith.addi %3, %arg1 : i32
    %c2048_i32 = arith.constant 2048 : i32
    %5 = arith.muli %4, %c2048_i32 : i32
    %c0 = arith.constant 0 : index
    %c0_1 = arith.constant 0 : index
    %6 = vector.load %arg3[%c0, %c0_1] : memref<16x128xf32, #tpu.memory_space<vmem>>, vector<16x128xf32>
    %c0_2 = arith.constant 0 : index
    %c0_3 = arith.constant 0 : index
    %7 = vector.load %arg2[%c0_2, %c0_3] : memref<16x128xf32, #tpu.memory_space<vmem>>, vector<16x128xf32>
    %c2048_i32_4 = arith.constant 2048 : i32
    %8 = arith.addi %5, %c2048_i32_4 : i32
    %c2048_i32_5 = arith.constant 2048 : i32
    %9 = arith.cmpi sgt, %8, %c2048_i32_5 : i32
    %true = arith.constant true
    %10 = arith.xori %9, %true : i1
    %11 = arith.extui %10 : i1 to i32
    %c0_i32_6 = arith.constant 0 : i32
    %12 = arith.cmpi ne, %11, %c0_i32_6 : i32
    scf.if %12 {
      %cst = arith.constant 0.000000e+00 : f32
      %15 = vector.broadcast %cst : f32 to vector<16x128xf32>
      %16 = arith.cmpf ogt, %6, %15 : vector<16x128xf32>
      %cst_8 = arith.constant 1.000000e+00 : f32
      %17 = vector.broadcast %cst_8 : f32 to vector<16x128xf32>
      %18 = arith.select %16, %6, %17 : vector<16x128xi1>, vector<16x128xf32>
      %cst_9 = arith.constant 1.000000e+00 : f32
      %19 = vector.broadcast %cst_9 : f32 to vector<16x128xf32>
      %20 = arith.select %16, %7, %19 : vector<16x128xi1>, vector<16x128xf32>
      %21 = math.log %18 : vector<16x128xf32>
      %22 = math.log %20 : vector<16x128xf32>
      %23 = arith.subf %21, %22 : vector<16x128xf32>
      %c0_10 = arith.constant 0 : index
      %c0_11 = arith.constant 0 : index
      %c0_12 = arith.constant 0 : index
      %24 = vector.load %arg4[%c0_10, %c0_11, %c0_12] : memref<1x1x128xf32, #tpu.memory_space<vmem>>, vector<1x1x128xf32>
      %cst_13 = arith.constant dense<0.000000e+00> : vector<128xf32>
      %25 = vector.multi_reduction <add>, %23, %cst_13 [0] : vector<16x128xf32> to vector<128xf32>
      %26 = vector.shape_cast %25 : vector<128xf32> to vector<1x1x128xf32>
      %27 = arith.addf %24, %26 : vector<1x1x128xf32>
      %c0_14 = arith.constant 0 : index
      %c0_15 = arith.constant 0 : index
      %c0_16 = arith.constant 0 : index
      %28 = vector.load %arg4[%c0_14, %c0_15, %c0_16] : memref<1x1x128xf32, #tpu.memory_space<vmem>>, vector<1x1x128xf32>
      tpu.vector_store %arg4[%c0_14, %c0_15, %c0_16], %27 {strides = array<i32>} : memref<1x1x128xf32, #tpu.memory_space<vmem>>, vector<1x1x128xf32>,
      %c0_17 = arith.constant 0 : index
      %c0_18 = arith.constant 0 : index
      %c0_19 = arith.constant 0 : index
      %29 = vector.load %arg5[%c0_17, %c0_18, %c0_19] : memref<1x1x128xf32, #tpu.memory_space<vmem>>, vector<1x1x128xf32>
      %30 = arith.mulf %23, %23 : vector<16x128xf32>
      %cst_20 = arith.constant dense<0.000000e+00> : vector<128xf32>
      %31 = vector.multi_reduction <add>, %30, %cst_20 [0] : vector<16x128xf32> to vector<128xf32>
      %32 = vector.shape_cast %31 : vector<128xf32> to vector<1x1x128xf32>
      %33 = arith.addf %29, %32 : vector<1x1x128xf32>
      %c0_21 = arith.constant 0 : index
      %c0_22 = arith.constant 0 : index
      %c0_23 = arith.constant 0 : index
      %34 = vector.load %arg5[%c0_21, %c0_22, %c0_23] : memref<1x1x128xf32, #tpu.memory_space<vmem>>, vector<1x1x128xf32>
      tpu.vector_store %arg5[%c0_21, %c0_22, %c0_23], %33 {strides = array<i32>} : memref<1x1x128xf32, #tpu.memory_space<vmem>>, vector<1x1x128xf32>,
      %c0_24 = arith.constant 0 : index
      %c0_25 = arith.constant 0 : index
      %c0_26 = arith.constant 0 : index
      %35 = vector.load %arg6[%c0_24, %c0_25, %c0_26] : memref<1x1x128xf32, #tpu.memory_space<vmem>>, vector<1x1x128xf32>
      %36 = arith.extui %16 : vector<16x128xi1> to vector<16x128xi32>
      %37 = arith.sitofp %36 : vector<16x128xi32> to vector<16x128xf32>
      %cst_27 = arith.constant dense<0.000000e+00> : vector<128xf32>
      %38 = vector.multi_reduction <add>, %37, %cst_27 [0] : vector<16x128xf32> to vector<128xf32>
      %39 = vector.shape_cast %38 : vector<128xf32> to vector<1x1x128xf32>
      %40 = arith.addf %35, %39 : vector<1x1x128xf32>
      %c0_28 = arith.constant 0 : index
      %c0_29 = arith.constant 0 : index
      %c0_30 = arith.constant 0 : index
      %41 = vector.load %arg6[%c0_28, %c0_29, %c0_30] : memref<1x1x128xf32, #tpu.memory_space<vmem>>, vector<1x1x128xf32>
      tpu.vector_store %arg6[%c0_28, %c0_29, %c0_30], %40 {strides = array<i32>} : memref<1x1x128xf32, #tpu.memory_space<vmem>>, vector<1x1x128xf32>,
    } else {
    }
    %13 = arith.extui %9 : i1 to i32
    %c0_i32_7 = arith.constant 0 : i32
    %14 = arith.cmpi ne, %13, %c0_i32_7 : i32
    scf.if %14 {
      %15 = tpu.iota {dimensions = array<i32: 0>} : vector<16x128xi32>
      %16 = tpu.iota {dimensions = array<i32: 1>} : vector<16x128xi32>
      %c128_i32 = arith.constant 128 : i32
      %17 = vector.broadcast %c128_i32 : i32 to vector<16x128xi32>
      %18 = arith.muli %15, %17 : vector<16x128xi32>
      %19 = vector.broadcast %5 : i32 to vector<16x128xi32>
      %20 = arith.addi %19, %18 : vector<16x128xi32>
      %21 = arith.addi %20, %16 : vector<16x128xi32>
      %c2048_i32_8 = arith.constant 2048 : i32
      %22 = vector.broadcast %c2048_i32_8 : i32 to vector<16x128xi32>
      %23 = arith.cmpi slt, %21, %22 : vector<16x128xi32>
      %cst = arith.constant 0.000000e+00 : f32
      %24 = vector.broadcast %cst : f32 to vector<16x128xf32>
      %25 = arith.cmpf ogt, %6, %24 : vector<16x128xf32>
      %26 = arith.andi %25, %23 : vector<16x128xi1>
      %cst_9 = arith.constant 1.000000e+00 : f32
      %27 = vector.broadcast %cst_9 : f32 to vector<16x128xf32>
      %28 = arith.select %26, %6, %27 : vector<16x128xi1>, vector<16x128xf32>
      %cst_10 = arith.constant 1.000000e+00 : f32
      %29 = vector.broadcast %cst_10 : f32 to vector<16x128xf32>
      %30 = arith.select %26, %7, %29 : vector<16x128xi1>, vector<16x128xf32>
      %31 = math.log %28 : vector<16x128xf32>
      %32 = math.log %30 : vector<16x128xf32>
      %33 = arith.subf %31, %32 : vector<16x128xf32>
      %c0_11 = arith.constant 0 : index
      %c0_12 = arith.constant 0 : index
      %c0_13 = arith.constant 0 : index
      %34 = vector.load %arg4[%c0_11, %c0_12, %c0_13] : memref<1x1x128xf32, #tpu.memory_space<vmem>>, vector<1x1x128xf32>
      %cst_14 = arith.constant dense<0.000000e+00> : vector<128xf32>
      %35 = vector.multi_reduction <add>, %33, %cst_14 [0] : vector<16x128xf32> to vector<128xf32>
      %36 = vector.shape_cast %35 : vector<128xf32> to vector<1x1x128xf32>
      %37 = arith.addf %34, %36 : vector<1x1x128xf32>
      %c0_15 = arith.constant 0 : index
      %c0_16 = arith.constant 0 : index
      %c0_17 = arith.constant 0 : index
      %38 = vector.load %arg4[%c0_15, %c0_16, %c0_17] : memref<1x1x128xf32, #tpu.memory_space<vmem>>, vector<1x1x128xf32>
      tpu.vector_store %arg4[%c0_15, %c0_16, %c0_17], %37 {strides = array<i32>} : memref<1x1x128xf32, #tpu.memory_space<vmem>>, vector<1x1x128xf32>,
      %c0_18 = arith.constant 0 : index
      %c0_19 = arith.constant 0 : index
      %c0_20 = arith.constant 0 : index
      %39 = vector.load %arg5[%c0_18, %c0_19, %c0_20] : memref<1x1x128xf32, #tpu.memory_space<vmem>>, vector<1x1x128xf32>
      %40 = arith.mulf %33, %33 : vector<16x128xf32>
      %cst_21 = arith.constant dense<0.000000e+00> : vector<128xf32>
      %41 = vector.multi_reduction <add>, %40, %cst_21 [0] : vector<16x128xf32> to vector<128xf32>
      %42 = vector.shape_cast %41 : vector<128xf32> to vector<1x1x128xf32>
      %43 = arith.addf %39, %42 : vector<1x1x128xf32>
      %c0_22 = arith.constant 0 : index
      %c0_23 = arith.constant 0 : index
      %c0_24 = arith.constant 0 : index
      %44 = vector.load %arg5[%c0_22, %c0_23, %c0_24] : memref<1x1x128xf32, #tpu.memory_space<vmem>>, vector<1x1x128xf32>
      tpu.vector_store %arg5[%c0_22, %c0_23, %c0_24], %43 {strides = array<i32>} : memref<1x1x128xf32, #tpu.memory_space<vmem>>, vector<1x1x128xf32>,
      %c0_25 = arith.constant 0 : index
      %c0_26 = arith.constant 0 : index
      %c0_27 = arith.constant 0 : index
      %45 = vector.load %arg6[%c0_25, %c0_26, %c0_27] : memref<1x1x128xf32, #tpu.memory_space<vmem>>, vector<1x1x128xf32>
      %46 = arith.extui %26 : vector<16x128xi1> to vector<16x128xi32>
      %47 = arith.sitofp %46 : vector<16x128xi32> to vector<16x128xf32>
      %cst_28 = arith.constant dense<0.000000e+00> : vector<128xf32>
      %48 = vector.multi_reduction <add>, %47, %cst_28 [0] : vector<16x128xf32> to vector<128xf32>
      %49 = vector.shape_cast %48 : vector<128xf32> to vector<1x1x128xf32>
      %50 = arith.addf %45, %49 : vector<1x1x128xf32>
      %c0_29 = arith.constant 0 : index
      %c0_30 = arith.constant 0 : index
      %c0_31 = arith.constant 0 : index
      %51 = vector.load %arg6[%c0_29, %c0_30, %c0_31] : memref<1x1x128xf32, #tpu.memory_space<vmem>>, vector<1x1x128xf32>
      tpu.vector_store %arg6[%c0_29, %c0_30, %c0_31], %50 {strides = array<i32>} : memref<1x1x128xf32, #tpu.memory_space<vmem>>, vector<1x1x128xf32>,
    } else {
    }
    return
  }
  func.func @transform_0(%arg0: i32, %arg1: i32) -> (i32, i32) {
    %c1_i32 = arith.constant 1 : i32
    %0 = arith.muli %arg0, %c1_i32 : i32
    %1 = arith.addi %0, %arg1 : i32
    %c0_i32 = arith.constant 0 : i32
    %2 = arith.minsi %1, %c0_i32 : i32
    %c0_i32_0 = arith.constant 0 : i32
    %c0_i32_1 = arith.constant 0 : i32
    return %2, %c0_i32_0 : i32, i32
  }
  func.func @transform_1(%arg0: i32, %arg1: i32) -> (i32, i32) {
    %c1_i32 = arith.constant 1 : i32
    %0 = arith.muli %arg0, %c1_i32 : i32
    %1 = arith.addi %0, %arg1 : i32
    %c0_i32 = arith.constant 0 : i32
    %2 = arith.minsi %1, %c0_i32 : i32
    %c0_i32_0 = arith.constant 0 : i32
    %c0_i32_1 = arith.constant 0 : i32
    return %2, %c0_i32_0 : i32, i32
  }
  func.func @transform_2(%arg0: i32, %arg1: i32) -> (i32, i32, i32) {
    %c0_i32 = arith.constant 0 : i32
    %c0_i32_0 = arith.constant 0 : i32
    %c0_i32_1 = arith.constant 0 : i32
    return %arg0, %c0_i32, %c0_i32_0 : i32, i32, i32
  }
  func.func @transform_3(%arg0: i32, %arg1: i32) -> (i32, i32, i32) {
    %c0_i32 = arith.constant 0 : i32
    %c0_i32_0 = arith.constant 0 : i32
    %c0_i32_1 = arith.constant 0 : i32
    return %arg0, %c0_i32, %c0_i32_0 : i32, i32, i32
  }
  func.func @transform_4(%arg0: i32, %arg1: i32) -> (i32, i32, i32) {
    %c0_i32 = arith.constant 0 : i32
    %c0_i32_0 = arith.constant 0 : i32
    %c0_i32_1 = arith.constant 0 : i32
    return %arg0, %c0_i32, %c0_i32_0 : i32, i32, i32
  }
}

</mosaic_0001>

<llo_original>
// kernel: tpu_custom_call.1
$region0: #{tpu_custom_call.1}
  #allocation0 [shape = 'u32[]', space=smem, size = 0x4, offset = 0x4, fixed_abs, tag = 'smem constant byte address 0x4 - core index']
  #allocation1 [shape = 'u32[72,128]{1,0:T(1,128)}', space=vmem, size = 0x9000, scoped, tag = 'internal scratch']
  %s0 = inlined_call_operand.hbm [shape: f32[16,128], index: 0, kind: input, shape index: {}]
  %s1 = inlined_call_operand.hbm [shape: f32[16,128], index: 1, kind: input, shape index: {}]
  %s2 = inlined_call_operand.hbm [shape: f32[1,1,128], index: 2, kind: output, shape index: {0}]
  %s3 = inlined_call_operand.hbm [shape: f32[1,1,128], index: 3, kind: output, shape index: {1}]
  %s4 = inlined_call_operand.hbm [shape: f32[1,1,128], index: 4, kind: output, shape index: {2}]
  %5 = xla_tuple %s2, %s3, %s4
  %s6 = sld [smem:[#allocation0]]
  $region54: #{tpu_custom_call.1} parent=0
    _
  %s8 = ssub.s32 1, %s6
  %s9 = scalar_select 0, %s8, %s6
  $region1: #{tpu_custom_call.1} parent=0
    #allocation2 [shape = 'u8[8192]{0}', space=vmem, size = 0x2000, scoped, tag = 'input window, operand 0, single buffered']
    #allocation3 [shape = 's32[1]{0}', space=sflag, size = 0x4, scoped, tag = 'scoped memory for tpu_custom_call.1']
    #allocation4 [shape = 's32[1]{0}', space=sflag, size = 0x4, scoped, tag = 'scoped memory for tpu_custom_call.1']
    #allocation5 [shape = 'u8[8192]{0}', space=vmem, size = 0x2000, scoped, tag = 'input window, operand 1, single buffered']
    #allocation6 [shape = 's32[1]{0}', space=sflag, size = 0x4, scoped, tag = 'scoped memory for tpu_custom_call.1']
    #allocation7 [shape = 'u8[512]{0}', space=vmem, size = 0x400, scoped, tag = 'output window, operand 0, single buffered']
    #allocation8 [shape = 'u8[512]{0}', space=vmem, size = 0x400, scoped, tag = 'output window, operand 1, single buffered']
    #allocation9 [shape = 's32[1]{0}', space=sflag, size = 0x4, scoped, tag = 'scoped memory for tpu_custom_call.1']
    #allocation10 [shape = 'u8[512]{0}', space=vmem, size = 0x400, scoped, tag = 'output window, operand 2, single buffered']
    %10 = vsyncpa [#allocation3], 0
    %11 = vsyncpa [#allocation6], 0
    %12 = vsyncpa [#allocation4], 0
    %13 = vsyncpa [#allocation9], 0
    // Predicated region
    $region2: #{tpu_custom_call.1} parent=1 // pred_check
      _
    $region3: #{tpu_custom_call.1} parent=1 // pred_check_branch
      %15 = sbr.rel (0) target = $region5
    $region4: #{tpu_custom_call.1} parent=1 // pred_region
      %s16 = sadd.s32 0, 0
      %p17 = scmp.lt.s32.totalorder %s16, 0
      %s18 = scalar_select %p17, %s16, 0
      %s19 = smul.u32 2, %s18
      %21 = vsyncadd [#allocation3], 0
      %s22 = smul.addr %s19, 8
      %s23 = scalar_lea.hbm %s0, %s22
      %s24 = sshll.u32 %s23, 4
      %s25 = int_to_ptr.hbm [resolvable:$true] %s24
      %s26 = sshll.u32 [#allocation2], 4
      %s27 = int_to_ptr.vmem [resolvable:$true] %s26
      %32 = dma.hbm_to_vmem [thread:$0]  %s25, 256, %s27, [#allocation3], 128, 128, 8
    $region5: #{tpu_custom_call.1} parent=1 // pred_fallthru
      _
    // Predicated region
    $region6: #{tpu_custom_call.1} parent=1 // pred_check
      _
    $region7: #{tpu_custom_call.1} parent=1 // pred_check_branch
      %34 = sbr.rel (0) target = $region9
    $region8: #{tpu_custom_call.1} parent=1 // pred_region
      %s35 = sadd.s32 0, 0
      %p36 = scmp.lt.s32.totalorder %s35, 0
      %s37 = scalar_select %p36, %s35, 0
      %s38 = smul.u32 2, %s37
      %40 = vsyncadd [#allocation6], 0
      %s41 = smul.addr %s38, 8
      %s42 = scalar_lea.hbm %s1, %s41
      %s43 = sshll.u32 %s42, 4
      %s44 = int_to_ptr.hbm [resolvable:$true] %s43
      %s45 = sshll.u32 [#allocation5], 4
      %s46 = int_to_ptr.vmem [resolvable:$true] %s45
      %51 = dma.hbm_to_vmem [thread:$0]  %s44, 256, %s46, [#allocation6], 128, 128, 8
    $region9: #{tpu_custom_call.1} parent=1 // pred_fallthru
      _
    // Predicated region
    $region10: #{tpu_custom_call.1} parent=1 // pred_check
      _
    $region11: #{tpu_custom_call.1} parent=1 // pred_check_branch
      %53 = sbr.rel (0) target = $region13
    $region12: #{tpu_custom_call.1} parent=1 // pred_region
      %55 = dma.done [#allocation3], 256
    $region13: #{tpu_custom_call.1} parent=1 // pred_fallthru
      _
    // Predicated region
    $region14: #{tpu_custom_call.1} parent=1 // pred_check
      _
    $region15: #{tpu_custom_call.1} parent=1 // pred_check_branch
      %57 = sbr.rel (0) target = $region17
    $region16: #{tpu_custom_call.1} parent=1 // pred_region
      %59 = dma.done [#allocation6], 256
    $region17: #{tpu_custom_call.1} parent=1 // pred_fallthru
      _
    %s60 = sadd.s32 0, 0
    %p61 = scmp.lt.s32.totalorder %s60, 0
    %s62 = scalar_select %p61, %s60, 0
    %s63 = smul.u32 2, %s62
    %s64 = sadd.s32 0, 0
    %p65 = scmp.lt.s32.totalorder %s64, 0
    %s66 = scalar_select %p65, %s64, 0
    %s67 = smul.u32 2, %s66
    %p68 = scmp.eq.s32.totalorder 0, 0
    // Predicated region
    $region18: #{tpu_custom_call.1} parent=1 // pred_check
      %p69 = pneg %p68
    $region19: #{tpu_custom_call.1} parent=1 // pred_check_branch
      %71 = sbr.rel (%p69) target = $region21
    $region20: #{tpu_custom_call.1} parent=1 // pred_region
      %72 = vst [vmem:[#allocation7] sm:$0x1] 0.0
      %73 = vst [vmem:[#allocation8] sm:$0x1] 0.0
      %74 = vst [vmem:[#allocation10] sm:$0x1] 0.0
    $region21: #{tpu_custom_call.1} parent=1 // pred_fallthru
      _
    %s75 = sadd.s32 0, 0
    %s76 = smul.u32 %s75, 2048
    %v77 = vld [vmem:[#allocation5] sm:$0xff]
    %v78 = vld [vmem:[#allocation5 + $0x8] sm:$0xff]
    %v79 = vld [vmem:[#allocation2] sm:$0xff]
    %v80 = vld [vmem:[#allocation2 + $0x8] sm:$0xff]
    %s81 = sadd.s32 %s76, 2048
    %p82 = scmp.gt.s32.totalorder %s81, 2048
    %p83 = scmp.le.s32.totalorder %s81, 2048
    // Predicated region
    $region22: #{tpu_custom_call.1} parent=1 // pred_check
      %p84 = pneg %p83
    $region23: #{tpu_custom_call.1} parent=1 // pred_check_branch
      %86 = sbr.rel (%p84) target = $region25
    $region24: #{tpu_custom_call.1} parent=1 // pred_region
      %vm87 = vcmp.gt.f32.partialorder %v77, 0.0
      %vm88 = vcmp.gt.f32.partialorder %v78, 0.0
      %v89 = vsel %vm87, %v77, 1.0
      %v90 = vsel %vm88, %v78, 1.0
      %v91 = vsel %vm87, %v79, 1.0
      %v92 = vsel %vm88, %v80, 1.0
      %v93 = vlog2.pop %v89
      %v94 = vmul.f32 %v93, 0.6931472
      %v95 = vlog2.pop %v90
      %v96 = vmul.f32 %v95, 0.6931472
      %v97 = vlog2.pop %v91
      %v98 = vmul.f32 %v97, 0.6931472
      %v99 = vlog2.pop %v92
      %v100 = vmul.f32 %v99, 0.6931472
      %v101 = vsub.f32 %v94, %v98
      %v102 = vsub.f32 %v96, %v100
      %v103 = vld [vmem:[#allocation7] sm:$0x1]
      %v104 = vadd.f32 %v101, %v102
      %v105 = vrot.slane %v104, 4
      %v106 = vadd.f32 %v104, %v105
      %v107 = vrot.slane %v106, 2
      %v108 = vadd.f32 %v106, %v107
      %v109 = vrot.slane %v108, 1
      %v110 = vadd.f32 %v108, %v109
      %v111 = vadd.f32 %v103, %v110
      %112 = vst [vmem:[#allocation7] sm:$0x1] %v111
      %v113 = vld [vmem:[#allocation8] sm:$0x1]
      %v114 = vmul.f32 %v101, %v101
      %v115 = vmul.f32 %v102, %v102
      %v116 = vadd.f32 %v114, %v115
      %v117 = vrot.slane %v116, 4
      %v118 = vadd.f32 %v116, %v117
      %v119 = vrot.slane %v118, 2
      %v120 = vadd.f32 %v118, %v119
      %v121 = vrot.slane %v120, 1
      %v122 = vadd.f32 %v120, %v121
      %v123 = vadd.f32 %v113, %v122
      %124 = vst [vmem:[#allocation8] sm:$0x1] %v123
      %v125 = vld [vmem:[#allocation10] sm:$0x1]
      %v126 = vsel %vm87, 1, 0
      %v127 = vsel %vm88, 1, 0
      %v128 = vcvt.s32.f32 %v126
      %v129 = vcvt.s32.f32 %v127
      %v130 = vadd.f32 %v128, %v129
      %v131 = vrot.slane %v130, 4
      %v132 = vadd.f32 %v130, %v131
      %v133 = vrot.slane %v132, 2
      %v134 = vadd.f32 %v132, %v133
      %v135 = vrot.slane %v134, 1
      %v136 = vadd.f32 %v134, %v135
      %v137 = vadd.f32 %v125, %v136
      %138 = vst [vmem:[#allocation10] sm:$0x1] %v137
    $region25: #{tpu_custom_call.1} parent=1 // pred_fallthru
      _
    // Predicated region
    $region26: #{tpu_custom_call.1} parent=1 // pred_check
      %p139 = pneg %p82
    $region27: #{tpu_custom_call.1} parent=1 // pred_check_branch
      %141 = sbr.rel (%p139) target = $region29
    $region28: #{tpu_custom_call.1} parent=1 // pred_region
      %v142 = vlaneseq
      %v143 = vshrl.u32 %v142, 7
      %v144 = vadd.s32 %v143, 8
      %v145 = vlaneseq
      %v146 = vand.u32 %v145, 127
      %v147 = vmul.u32 %v143, 128
      %v148 = vmul.u32 %v144, 128
      %v149 = vstv %s76
      %v150 = vadd.s32 %v149, %v147
      %v151 = vadd.s32 %v149, %v148
      %v152 = vadd.s32 %v150, %v146
      %v153 = vadd.s32 %v151, %v146
      %vm154 = vcmp.lt.s32.totalorder %v152, 2048
      %vm155 = vcmp.lt.s32.totalorder %v153, 2048
      %vm156 = vcmp.gt.f32.partialorder %v77, 0.0
      %vm157 = vcmp.gt.f32.partialorder %v78, 0.0
      %vm158 = vmand %vm156, %vm154
      %vm159 = vmand %vm157, %vm155
      %v160 = vsel %vm158, %v77, 1.0
      %v161 = vsel %vm159, %v78, 1.0
      %v162 = vsel %vm158, %v79, 1.0
      %v163 = vsel %vm159, %v80, 1.0
      %v164 = vlog2.pop %v160
      %v165 = vmul.f32 %v164, 0.6931472
      %v166 = vlog2.pop %v161
      %v167 = vmul.f32 %v166, 0.6931472
      %v168 = vlog2.pop %v162
      %v169 = vmul.f32 %v168, 0.6931472
      %v170 = vlog2.pop %v163
      %v171 = vmul.f32 %v170, 0.6931472
      %v172 = vsub.f32 %v165, %v169
      %v173 = vsub.f32 %v167, %v171
      %v174 = vld [vmem:[#allocation7] sm:$0x1]
      %v175 = vadd.f32 %v172, %v173
      %v176 = vrot.slane %v175, 4
      %v177 = vadd.f32 %v175, %v176
      %v178 = vrot.slane %v177, 2
      %v179 = vadd.f32 %v177, %v178
      %v180 = vrot.slane %v179, 1
      %v181 = vadd.f32 %v179, %v180
      %v182 = vadd.f32 %v174, %v181
      %183 = vst [vmem:[#allocation7] sm:$0x1] %v182
      %v184 = vld [vmem:[#allocation8] sm:$0x1]
      %v185 = vmul.f32 %v172, %v172
      %v186 = vmul.f32 %v173, %v173
      %v187 = vadd.f32 %v185, %v186
      %v188 = vrot.slane %v187, 4
      %v189 = vadd.f32 %v187, %v188
      %v190 = vrot.slane %v189, 2
      %v191 = vadd.f32 %v189, %v190
      %v192 = vrot.slane %v191, 1
      %v193 = vadd.f32 %v191, %v192
      %v194 = vadd.f32 %v184, %v193
      %195 = vst [vmem:[#allocation8] sm:$0x1] %v194
      %v196 = vld [vmem:[#allocation10] sm:$0x1]
      %v197 = vsel %vm158, 1, 0
      %v198 = vsel %vm159, 1, 0
      %v199 = vcvt.s32.f32 %v197
      %v200 = vcvt.s32.f32 %v198
      %v201 = vadd.f32 %v199, %v200
      %v202 = vrot.slane %v201, 4
      %v203 = vadd.f32 %v201, %v202
      %v204 = vrot.slane %v203, 2
      %v205 = vadd.f32 %v203, %v204
      %v206 = vrot.slane %v205, 1
      %v207 = vadd.f32 %v205, %v206
      %v208 = vadd.f32 %v196, %v207
      %209 = vst [vmem:[#allocation10] sm:$0x1] %v208
    $region29: #{tpu_custom_call.1} parent=1 // pred_fallthru
      _
    // Predicated region
    $region30: #{tpu_custom_call.1} parent=1 // pred_check
      _
    $region31: #{tpu_custom_call.1} parent=1 // pred_check_branch
      %211 = sbr.rel (0) target = $region33
    $region32: #{tpu_custom_call.1} parent=1 // pred_region
      %213 = vsyncadd [#allocation4], 0
      %s215 = sshll.u32 [#allocation7], 4
      %s216 = int_to_ptr.vmem [resolvable:$true] %s215
      %s217 = sshll.u32 %s2, 4
      %s218 = int_to_ptr.hbm [resolvable:$true] %s217
      %220 = dma.vmem_to_hbm [thread:$0]  %s216, 16, %s218, [#allocation4]
    $region33: #{tpu_custom_call.1} parent=1 // pred_fallthru
      _
    // Predicated region
    $region34: #{tpu_custom_call.1} parent=1 // pred_check
      _
    $region35: #{tpu_custom_call.1} parent=1 // pred_check_branch
      %222 = sbr.rel (0) target = $region37
    $region36: #{tpu_custom_call.1} parent=1 // pred_region
      %224 = vsyncadd [#allocation9], 0
      %s226 = sshll.u32 [#allocation8], 4
      %s227 = int_to_ptr.vmem [resolvable:$true] %s226
      %s228 = sshll.u32 %s3, 4
      %s229 = int_to_ptr.hbm [resolvable:$true] %s228
      %231 = dma.vmem_to_hbm [thread:$0]  %s227, 16, %s229, [#allocation9]
    $region37: #{tpu_custom_call.1} parent=1 // pred_fallthru
      _
    // Predicated region
    $region38: #{tpu_custom_call.1} parent=1 // pred_check
      _
    $region39: #{tpu_custom_call.1} parent=1 // pred_check_branch
      %233 = sbr.rel (0) target = $region41
    $region40: #{tpu_custom_call.1} parent=1 // pred_region
      %235 = vsyncadd [#allocation9], 0
      %s237 = sshll.u32 [#allocation10], 4
      %s238 = int_to_ptr.vmem [resolvable:$true] %s237
      %s239 = sshll.u32 %s4, 4
      %s240 = int_to_ptr.hbm [resolvable:$true] %s239
      %242 = dma.vmem_to_hbm [thread:$0]  %s238, 16, %s240, [#allocation9]
    $region41: #{tpu_custom_call.1} parent=1 // pred_fallthru
      _
    // Predicated region
    $region42: #{tpu_custom_call.1} parent=1 // pred_check
      _
    $region43: #{tpu_custom_call.1} parent=1 // pred_check_branch
      %244 = sbr.rel (0) target = $region45
    $region44: #{tpu_custom_call.1} parent=1 // pred_region
      %246 = dma.done [#allocation4], 16
    $region45: #{tpu_custom_call.1} parent=1 // pred_fallthru
      _
    // Predicated region
    $region46: #{tpu_custom_call.1} parent=1 // pred_check
      _
    $region47: #{tpu_custom_call.1} parent=1 // pred_check_branch
      %248 = sbr.rel (0) target = $region49
    $region48: #{tpu_custom_call.1} parent=1 // pred_region
      %250 = dma.done [#allocation9], 16
    $region49: #{tpu_custom_call.1} parent=1 // pred_fallthru
      _
    // Predicated region
    $region50: #{tpu_custom_call.1} parent=1 // pred_check
      _
    $region51: #{tpu_custom_call.1} parent=1 // pred_check_branch
      %252 = sbr.rel (0) target = $region53
    $region52: #{tpu_custom_call.1} parent=1 // pred_region
      %254 = dma.done [#allocation9], 16
    $region53: #{tpu_custom_call.1} parent=1 // pred_fallthru
      _
    %255 = vsyncpa [#allocation3], 1
    %256 = vsyncpa [#allocation6], 1
    %257 = vsyncpa [#allocation4], 1
    %258 = vsyncpa [#allocation9], 1

</llo_original>
